<compile_context>
chip_gen: v6e
topology: v6e:2x2x1
jax: 0.10.0
libtpu: 0.0.40
codegen_flags: <defaults>
</compile_context>

<pallas_src>
import jax
import jax.numpy as jnp
from jax.experimental import pallas as pl
from jax.experimental.pallas import tpu as pltpu


def _round_up(x, m):
    return ((x + m - 1) // m) * m


def _rating_pred_kernel(u_rep_ref, i_rep_ref, u_imp_ref, i_imp_ref, out_ref):
    # Layouts (per grid step):
    #   u_rep_ref / i_rep_ref : (A, h1, TB)  -- batch TB on the lane axis
    #   u_imp_ref / i_imp_ref : (A, TB)
    #   out_ref               : (A, TB)
    # VPU multiply in native dtype (bf16 VALUs on v6e/v7x), accumulate the h1
    # reduction (sublane axis) in f32, then one importance multiply per output
    # element and a lane-dense store.
    prod = u_rep_ref[...] * i_rep_ref[...]                          # (A, h1, TB)
    asp_rating = jnp.sum(prod, axis=1, dtype=jnp.float32)           # (A, TB) f32 accum
    imp = u_imp_ref[...].astype(jnp.float32) * i_imp_ref[...].astype(jnp.float32)
    out_ref[...] = (imp * asp_rating).astype(out_ref.dtype)


def anr_rating_pred(user_asp_rep, item_asp_rep, user_asp_impt, item_asp_impt,
                    *, batch_tile=512):
    """Per-aspect dot products + importance scaling.

    Inputs keep the PyTorch layout:
      user_asp_rep / item_asp_rep   : (bsz, num_aspects, h1)
      user_asp_impt / item_asp_impt : (bsz, num_aspects)
    Returns (bsz, num_aspects) in user_asp_rep.dtype.
    """
    bsz, num_aspects, h1 = user_asp_rep.shape
    out_dtype = user_asp_rep.dtype

    # Wrapper-side lane-dense layout: batch on the last (lane) axis.
    u_rep = jnp.transpose(user_asp_rep, (1, 2, 0))    # (A, h1, B)
    i_rep = jnp.transpose(item_asp_rep, (1, 2, 0))    # (A, h1, B)
    u_imp = jnp.transpose(user_asp_impt, (1, 0))      # (A, B)
    i_imp = jnp.transpose(item_asp_impt, (1, 0))      # (A, B)

    # Batch tile: multiple of 128 lanes, capped at batch_tile (sweep 512-2048 for
    # large-batch production shapes; 512 is VMEM-safe on v5e/v6e/v7x).
    tb = min(batch_tile, _round_up(bsz, 128))
    b_pad = _round_up(bsz, tb)
    if b_pad != bsz:
        pad = b_pad - bsz
        u_rep = jnp.pad(u_rep, ((0, 0), (0, 0), (0, pad)))
        i_rep = jnp.pad(i_rep, ((0, 0), (0, 0), (0, pad)))
        u_imp = jnp.pad(u_imp, ((0, 0), (0, pad)))
        i_imp = jnp.pad(i_imp, ((0, 0), (0, pad)))

    out_t = pl.pallas_call(
        _rating_pred_kernel,
        out_shape=jax.ShapeDtypeStruct((num_aspects, b_pad), out_dtype),
        grid_spec=pltpu.PrefetchScalarGridSpec(
            num_scalar_prefetch=0,
            grid=(b_pad // tb,),
            in_specs=[
                pl.BlockSpec((num_aspects, h1, tb), lambda i: (0, 0, i)),
                pl.BlockSpec((num_aspects, h1, tb), lambda i: (0, 0, i)),
                pl.BlockSpec((num_aspects, tb), lambda i: (0, i)),
                pl.BlockSpec((num_aspects, tb), lambda i: (0, i)),
            ],
            out_specs=pl.BlockSpec((num_aspects, tb), lambda i: (0, i)),
        ),
        compiler_params=pltpu.CompilerParams(
            dimension_semantics=("parallel",),
            vmem_limit_bytes=64 << 20,
        ),
    )(u_rep, i_rep, u_imp, i_imp)

    # Back to PyTorch output layout (bsz, num_aspects), dropping batch padding.
    return jnp.transpose(out_t[:, :bsz], (1, 0))


class ANRRatingPredParams:
    """Deterministic parameter init matching the PyTorch __init__ (all zeros)."""

    def __init__(self, num_users, num_items):
        self.global_offset = jnp.zeros((1,), jnp.float32)
        self.uid_user_offset = jnp.zeros((num_users, 1), jnp.float32)
        self.iid_item_offset = jnp.zeros((num_items, 1), jnp.float32)


def anr_rating_pred_forward(params, user_asp_rep, item_asp_rep,
                            user_asp_impt, item_asp_impt, batch_uid, batch_iid):
    # Embedding lookups (computed but unused by the PyTorch forward's return).
    _batch_user_offset = jnp.take(params.uid_user_offset, batch_uid, axis=0)  # (bsz, 1)
    _batch_item_offset = jnp.take(params.iid_item_offset, batch_iid, axis=0)  # (bsz, 1)
    # Hot path: per-aspect dot products + importance scaling, in Pallas.
    return anr_rating_pred(user_asp_rep, item_asp_rep, user_asp_impt, item_asp_impt)


def _reference(user_asp_rep, item_asp_rep, user_asp_impt, item_asp_impt):
    return user_asp_impt * item_asp_impt * jnp.sum(
        user_asp_rep.astype(jnp.float32) * item_asp_rep.astype(jnp.float32), axis=-1
    ).astype(user_asp_rep.dtype)


if __name__ == "__main__":
    num_aspects, h1 = 8, 32
    num_users, num_items = 16, 16
    key = jax.random.PRNGKey(0)

    # Case 1: small demo shapes (single grid step, batch padded to one 128-lane tile).
    bsz = 4
    k1, k2, k3, k4, k5, k6, key = jax.random.split(key, 7)
    user_asp_rep = jax.random.normal(k1, (bsz, num_aspects, h1), jnp.float32)
    item_asp_rep = jax.random.normal(k2, (bsz, num_aspects, h1), jnp.float32)
    user_asp_impt = jax.nn.softmax(jax.random.normal(k3, (bsz, num_aspects), jnp.float32), -1)
    item_asp_impt = jax.nn.softmax(jax.random.normal(k4, (bsz, num_aspects), jnp.float32), -1)
    batch_uid = jax.random.randint(k5, (bsz,), 0, num_users)
    batch_iid = jax.random.randint(k6, (bsz,), 0, num_items)

    params = ANRRatingPredParams(num_users, num_items)
    out = anr_rating_pred_forward(params, user_asp_rep, item_asp_rep,
                                  user_asp_impt, item_asp_impt, batch_uid, batch_iid)
    out = jax.block_until_ready(out)
    ref = user_asp_impt * item_asp_impt * jnp.sum(user_asp_rep * item_asp_rep, axis=-1)
    assert out.shape == (bsz, num_aspects)
    assert jnp.allclose(out, ref, atol=1e-5, rtol=1e-5), "mismatch vs reference (case 1)"

    # Case 2: non-multiple batch, multiple grid steps (exercises tiling + padding).
    bsz2 = 300
    k1, k2, k3, k4, key = jax.random.split(key, 5)
    u_rep2 = jax.random.normal(k1, (bsz2, num_aspects, h1), jnp.float32)
    i_rep2 = jax.random.normal(k2, (bsz2, num_aspects, h1), jnp.float32)
    u_imp2 = jax.nn.softmax(jax.random.normal(k3, (bsz2, num_aspects), jnp.float32), -1)
    i_imp2 = jax.nn.softmax(jax.random.normal(k4, (bsz2, num_aspects), jnp.float32), -1)
    out2 = anr_rating_pred(u_rep2, i_rep2, u_imp2, i_imp2, batch_tile=128)
    out2 = jax.block_until_ready(out2)
    ref2 = u_imp2 * i_imp2 * jnp.sum(u_rep2 * i_rep2, axis=-1)
    assert out2.shape == (bsz2, num_aspects)
    assert jnp.allclose(out2, ref2, atol=1e-5, rtol=1e-5), "mismatch vs reference (case 2)"

    print("KERNEL_OK")
</pallas_src>

<mosaic_0001>
module attributes {stable_mosaic.version = 11 : i64} {
  func.func @_rating_pred_kernel(%arg0: i32, %arg1: memref<8x32x128xf32, #tpu.memory_space<vmem>>, %arg2: memref<8x32x128xf32, #tpu.memory_space<vmem>>, %arg3: memref<8x128xf32, #tpu.memory_space<vmem>>, %arg4: memref<8x128xf32, #tpu.memory_space<vmem>>, %arg5: memref<8x128xf32, #tpu.memory_space<vmem>>) attributes {dimension_semantics = [#tpu.dimension_semantics<parallel>], iteration_bounds = array<i64: 1>, scalar_prefetch = 0 : i64, scratch_operands = 0 : i64, tpu.core_type = #tpu.core_type<tc>, window_params = [{transform_indices = @transform_0, window_bounds = array<i64: 8, 32, 128>}, {transform_indices = @transform_1, window_bounds = array<i64: 8, 32, 128>}, {transform_indices = @transform_2, window_bounds = array<i64: 8, 128>}, {transform_indices = @transform_3, window_bounds = array<i64: 8, 128>}, {transform_indices = @transform_4, window_bounds = array<i64: 8, 128>}]} {
    %c0 = arith.constant 0 : index
    %c0_0 = arith.constant 0 : index
    %c0_1 = arith.constant 0 : index
    %0 = vector.load %arg1[%c0, %c0_0, %c0_1] : memref<8x32x128xf32, #tpu.memory_space<vmem>>, vector<8x32x128xf32>
    %c0_2 = arith.constant 0 : index
    %c0_3 = arith.constant 0 : index
    %c0_4 = arith.constant 0 : index
    %1 = vector.load %arg2[%c0_2, %c0_3, %c0_4] : memref<8x32x128xf32, #tpu.memory_space<vmem>>, vector<8x32x128xf32>
    %2 = arith.mulf %0, %1 : vector<8x32x128xf32>
    %cst = arith.constant dense<0.000000e+00> : vector<8x128xf32>
    %3 = vector.multi_reduction <add>, %2, %cst [1] : vector<8x32x128xf32> to vector<8x128xf32>
    %c0_5 = arith.constant 0 : index
    %c0_6 = arith.constant 0 : index
    %4 = vector.load %arg3[%c0_5, %c0_6] : memref<8x128xf32, #tpu.memory_space<vmem>>, vector<8x128xf32>
    %c0_7 = arith.constant 0 : index
    %c0_8 = arith.constant 0 : index
    %5 = vector.load %arg4[%c0_7, %c0_8] : memref<8x128xf32, #tpu.memory_space<vmem>>, vector<8x128xf32>
    %6 = arith.mulf %4, %5 : vector<8x128xf32>
    %7 = arith.mulf %6, %3 : vector<8x128xf32>
    %c0_9 = arith.constant 0 : index
    %c0_10 = arith.constant 0 : index
    %8 = vector.load %arg5[%c0_9, %c0_10] : memref<8x128xf32, #tpu.memory_space<vmem>>, vector<8x128xf32>
    tpu.vector_store %arg5[%c0_9, %c0_10], %7 {strides = array<i32>} : memref<8x128xf32, #tpu.memory_space<vmem>>, vector<8x128xf32>,
    return
  }
  func.func @transform_0(%arg0: i32) -> (i32, i32, i32) {
    %c0_i32 = arith.constant 0 : i32
    %c0_i32_0 = arith.constant 0 : i32
    %c0_i32_1 = arith.constant 0 : i32
    return %c0_i32, %c0_i32_0, %arg0 : i32, i32, i32
  }
  func.func @transform_1(%arg0: i32) -> (i32, i32, i32) {
    %c0_i32 = arith.constant 0 : i32
    %c0_i32_0 = arith.constant 0 : i32
    %c0_i32_1 = arith.constant 0 : i32
    return %c0_i32, %c0_i32_0, %arg0 : i32, i32, i32
  }
  func.func @transform_2(%arg0: i32) -> (i32, i32) {
    %c0_i32 = arith.constant 0 : i32
    %c0_i32_0 = arith.constant 0 : i32
    return %c0_i32, %arg0 : i32, i32
  }
  func.func @transform_3(%arg0: i32) -> (i32, i32) {
    %c0_i32 = arith.constant 0 : i32
    %c0_i32_0 = arith.constant 0 : i32
    return %c0_i32, %arg0 : i32, i32
  }
  func.func @transform_4(%arg0: i32) -> (i32, i32) {
    %c0_i32 = arith.constant 0 : i32
    %c0_i32_0 = arith.constant 0 : i32
    return %c0_i32, %arg0 : i32, i32
  }
}

</mosaic_0001>

<llo_original>
// kernel: tpu_custom_call.1
$region0: #{tpu_custom_call.1}
  #allocation0 [shape = 'u32[]', space=smem, size = 0x4, offset = 0x4, fixed_abs, tag = 'smem constant byte address 0x4 - core index']
  #allocation1 [shape = 'u32[144,128]{1,0:T(1,128)}', space=vmem, size = 0x12000, scoped, tag = 'internal scratch']
  %s0 = inlined_call_operand.hbm [shape: f32[8,32,128], index: 0, kind: input, shape index: {}]
  %s1 = inlined_call_operand.hbm [shape: f32[8,32,128], index: 1, kind: input, shape index: {}]
  %s2 = inlined_call_operand.hbm [shape: f32[8,128], index: 2, kind: input, shape index: {}]
  %s3 = inlined_call_operand.hbm [shape: f32[8,128], index: 3, kind: input, shape index: {}]
  %s4 = inlined_call_operand.hbm [shape: f32[8,128], index: 4, kind: output, shape index: {}]
  %s5 = sld [smem:[#allocation0]]
  $region42: #{tpu_custom_call.1} parent=0
    _
  %s7 = ssub.s32 1, %s5
  %s8 = scalar_select 0, %s7, %s5
  $region1: #{tpu_custom_call.1} parent=0
    #allocation2 [shape = 'u8[131072]{0}', space=vmem, size = 0x20000, scoped, tag = 'input window, operand 0, single buffered']
    #allocation3 [shape = 's32[1]{0}', space=sflag, size = 0x4, scoped, tag = 'scoped memory for tpu_custom_call.1']
    #allocation4 [shape = 's32[1]{0}', space=sflag, size = 0x4, scoped, tag = 'scoped memory for tpu_custom_call.1']
    #allocation5 [shape = 'u8[131072]{0}', space=vmem, size = 0x20000, scoped, tag = 'input window, operand 1, single buffered']
    #allocation6 [shape = 's32[1]{0}', space=sflag, size = 0x4, scoped, tag = 'scoped memory for tpu_custom_call.1']
    #allocation7 [shape = 'u8[4096]{0}', space=vmem, size = 0x1000, scoped, tag = 'input window, operand 2, single buffered']
    #allocation8 [shape = 'u8[4096]{0}', space=vmem, size = 0x1000, scoped, tag = 'input window, operand 3, single buffered']
    #allocation9 [shape = 's32[1]{0}', space=sflag, size = 0x4, scoped, tag = 'scoped memory for tpu_custom_call.1']
    #allocation10 [shape = 'u8[4096]{0}', space=vmem, size = 0x1000, scoped, tag = 'output window, operand 0, single buffered']
    %9 = vsyncpa [#allocation3], 0
    %10 = vsyncpa [#allocation6], 0
    %11 = vsyncpa [#allocation9], 0
    %12 = vsyncpa [#allocation4], 0
    // Predicated region
    $region2: #{tpu_custom_call.1} parent=1 // pred_check
      _
    $region3: #{tpu_custom_call.1} parent=1 // pred_check_branch
      %14 = sbr.rel (0) target = $region5
    $region4: #{tpu_custom_call.1} parent=1 // pred_region
      %s16 = ssub.s32 4096, 4096
      %17 = vsyncadd [#allocation3], %s16
      %s18 = sshll.u32 [#allocation2], 4
      %s19 = int_to_ptr.vmem [resolvable:$true] %s18
      %24 = dma.hbm_to_vmem [thread:$0]  %s0, 4096, %s19, [#allocation3], 128, 128, 8
    $region5: #{tpu_custom_call.1} parent=1 // pred_fallthru
      _
    // Predicated region
    $region6: #{tpu_custom_call.1} parent=1 // pred_check
      _
    $region7: #{tpu_custom_call.1} parent=1 // pred_check_branch
      %26 = sbr.rel (0) target = $region9
    $region8: #{tpu_custom_call.1} parent=1 // pred_region
      %s28 = ssub.s32 4096, 4096
      %29 = vsyncadd [#allocation6], %s28
      %s30 = sshll.u32 [#allocation5], 4
      %s31 = int_to_ptr.vmem [resolvable:$true] %s30
      %36 = dma.hbm_to_vmem [thread:$0]  %s1, 4096, %s31, [#allocation6], 128, 128, 8
    $region9: #{tpu_custom_call.1} parent=1 // pred_fallthru
      _
    // Predicated region
    $region10: #{tpu_custom_call.1} parent=1 // pred_check
      _
    $region11: #{tpu_custom_call.1} parent=1 // pred_check_branch
      %38 = sbr.rel (0) target = $region13
    $region12: #{tpu_custom_call.1} parent=1 // pred_region
      %s40 = ssub.s32 128, 128
      %41 = vsyncadd [#allocation6], %s40
      %s43 = sshll.u32 [#allocation7], 4
      %s44 = int_to_ptr.vmem [resolvable:$true] %s43
      %46 = dma.hbm_to_vmem [thread:$0]  %s2, 128, %s44, [#allocation6]
    $region13: #{tpu_custom_call.1} parent=1 // pred_fallthru
      _
    // Predicated region
    $region14: #{tpu_custom_call.1} parent=1 // pred_check
      _
    $region15: #{tpu_custom_call.1} parent=1 // pred_check_branch
      %48 = sbr.rel (0) target = $region17
    $region16: #{tpu_custom_call.1} parent=1 // pred_region
      %s50 = ssub.s32 128, 128
      %51 = vsyncadd [#allocation9], %s50
      %s53 = sshll.u32 [#allocation8], 4
      %s54 = int_to_ptr.vmem [resolvable:$true] %s53
      %56 = dma.hbm_to_vmem [thread:$0]  %s3, 128, %s54, [#allocation9]
    $region17: #{tpu_custom_call.1} parent=1 // pred_fallthru
      _
    // Predicated region
    $region18: #{tpu_custom_call.1} parent=1 // pred_check
      _
    $region19: #{tpu_custom_call.1} parent=1 // pred_check_branch
      %58 = sbr.rel (0) target = $region21
    $region20: #{tpu_custom_call.1} parent=1 // pred_region
      %59 = dma.done [#allocation3], 4096
    $region21: #{tpu_custom_call.1} parent=1 // pred_fallthru
      _
    // Predicated region
    $region22: #{tpu_custom_call.1} parent=1 // pred_check
      _
    $region23: #{tpu_custom_call.1} parent=1 // pred_check_branch
      %61 = sbr.rel (0) target = $region25
    $region24: #{tpu_custom_call.1} parent=1 // pred_region
      %62 = dma.done [#allocation6], 4096
    $region25: #{tpu_custom_call.1} parent=1 // pred_fallthru
      _
    // Predicated region
    $region26: #{tpu_custom_call.1} parent=1 // pred_check
      _
    $region27: #{tpu_custom_call.1} parent=1 // pred_check_branch
      %64 = sbr.rel (0) target = $region29
    $region28: #{tpu_custom_call.1} parent=1 // pred_region
      %65 = dma.done [#allocation6], 128
    $region29: #{tpu_custom_call.1} parent=1 // pred_fallthru
      _
    // Predicated region
    $region30: #{tpu_custom_call.1} parent=1 // pred_check
      _
    $region31: #{tpu_custom_call.1} parent=1 // pred_check_branch
      %67 = sbr.rel (0) target = $region33
    $region32: #{tpu_custom_call.1} parent=1 // pred_region
      %68 = dma.done [#allocation9], 128
    $region33: #{tpu_custom_call.1} parent=1 // pred_fallthru
      _
    %v69 = vld [vmem:[#allocation2] sm:$0xff]
    %v70 = vld [vmem:[#allocation2 + $0x8] sm:$0xff]
    %v71 = vld [vmem:[#allocation2 + $0x10] sm:$0xff]
    %v72 = vld [vmem:[#allocation2 + $0x18] sm:$0xff]
    %v73 = vld [vmem:[#allocation2 + $0x20] sm:$0xff]
    %v74 = vld [vmem:[#allocation2 + $0x28] sm:$0xff]
    %v75 = vld [vmem:[#allocation2 + $0x30] sm:$0xff]
    %v76 = vld [vmem:[#allocation2 + $0x38] sm:$0xff]
    %v77 = vld [vmem:[#allocation2 + $0x40] sm:$0xff]
    %v78 = vld [vmem:[#allocation2 + $0x48] sm:$0xff]
    %v79 = vld [vmem:[#allocation2 + $0x50] sm:$0xff]
    %v80 = vld [vmem:[#allocation2 + $0x58] sm:$0xff]
    %v81 = vld [vmem:[#allocation2 + $0x60] sm:$0xff]
    %v82 = vld [vmem:[#allocation2 + $0x68] sm:$0xff]
    %v83 = vld [vmem:[#allocation2 + $0x70] sm:$0xff]
    %v84 = vld [vmem:[#allocation2 + $0x78] sm:$0xff]
    %v85 = vld [vmem:[#allocation2 + $0x80] sm:$0xff]
    %v86 = vld [vmem:[#allocation2 + $0x88] sm:$0xff]
    %v87 = vld [vmem:[#allocation2 + $0x90] sm:$0xff]
    %v88 = vld [vmem:[#allocation2 + $0x98] sm:$0xff]
    %v89 = vld [vmem:[#allocation2 + $0xa0] sm:$0xff]
    %v90 = vld [vmem:[#allocation2 + $0xa8] sm:$0xff]
    %v91 = vld [vmem:[#allocation2 + $0xb0] sm:$0xff]
    %v92 = vld [vmem:[#allocation2 + $0xb8] sm:$0xff]
    %v93 = vld [vmem:[#allocation2 + $0xc0] sm:$0xff]
    %v94 = vld [vmem:[#allocation2 + $0xc8] sm:$0xff]
    %v95 = vld [vmem:[#allocation2 + $0xd0] sm:$0xff]
    %v96 = vld [vmem:[#allocation2 + $0xd8] sm:$0xff]
    %v97 = vld [vmem:[#allocation2 + $0xe0] sm:$0xff]
    %v98 = vld [vmem:[#allocation2 + $0xe8] sm:$0xff]
    %v99 = vld [vmem:[#allocation2 + $0xf0] sm:$0xff]
    %v100 = vld [vmem:[#allocation2 + $0xf8] sm:$0xff]
    %v101 = vld [vmem:[#allocation5] sm:$0xff]
    %v102 = vld [vmem:[#allocation5 + $0x8] sm:$0xff]
    %v103 = vld [vmem:[#allocation5 + $0x10] sm:$0xff]
    %v104 = vld [vmem:[#allocation5 + $0x18] sm:$0xff]
    %v105 = vld [vmem:[#allocation5 + $0x20] sm:$0xff]
    %v106 = vld [vmem:[#allocation5 + $0x28] sm:$0xff]
    %v107 = vld [vmem:[#allocation5 + $0x30] sm:$0xff]
    %v108 = vld [vmem:[#allocation5 + $0x38] sm:$0xff]
    %v109 = vld [vmem:[#allocation5 + $0x40] sm:$0xff]
    %v110 = vld [vmem:[#allocation5 + $0x48] sm:$0xff]
    %v111 = vld [vmem:[#allocation5 + $0x50] sm:$0xff]
    %v112 = vld [vmem:[#allocation5 + $0x58] sm:$0xff]
    %v113 = vld [vmem:[#allocation5 + $0x60] sm:$0xff]
    %v114 = vld [vmem:[#allocation5 + $0x68] sm:$0xff]
    %v115 = vld [vmem:[#allocation5 + $0x70] sm:$0xff]
    %v116 = vld [vmem:[#allocation5 + $0x78] sm:$0xff]
    %v117 = vld [vmem:[#allocation5 + $0x80] sm:$0xff]
    %v118 = vld [vmem:[#allocation5 + $0x88] sm:$0xff]
    %v119 = vld [vmem:[#allocation5 + $0x90] sm:$0xff]
    %v120 = vld [vmem:[#allocation5 + $0x98] sm:$0xff]
    %v121 = vld [vmem:[#allocation5 + $0xa0] sm:$0xff]
    %v122 = vld [vmem:[#allocation5 + $0xa8] sm:$0xff]
    %v123 = vld [vmem:[#allocation5 + $0xb0] sm:$0xff]
    %v124 = vld [vmem:[#allocation5 + $0xb8] sm:$0xff]
    %v125 = vld [vmem:[#allocation5 + $0xc0] sm:$0xff]
    %v126 = vld [vmem:[#allocation5 + $0xc8] sm:$0xff]
    %v127 = vld [vmem:[#allocation5 + $0xd0] sm:$0xff]
    %v128 = vld [vmem:[#allocation5 + $0xd8] sm:$0xff]
    %v129 = vld [vmem:[#allocation5 + $0xe0] sm:$0xff]
    %v130 = vld [vmem:[#allocation5 + $0xe8] sm:$0xff]
    %v131 = vld [vmem:[#allocation5 + $0xf0] sm:$0xff]
    %v132 = vld [vmem:[#allocation5 + $0xf8] sm:$0xff]
    %v133 = vmul.f32 %v69, %v101
    %v134 = vmul.f32 %v70, %v102
    %v135 = vmul.f32 %v71, %v103
    %v136 = vmul.f32 %v72, %v104
    %v137 = vmul.f32 %v73, %v105
    %v138 = vmul.f32 %v74, %v106
    %v139 = vmul.f32 %v75, %v107
    %v140 = vmul.f32 %v76, %v108
    %v141 = vmul.f32 %v77, %v109
    %v142 = vmul.f32 %v78, %v110
    %v143 = vmul.f32 %v79, %v111
    %v144 = vmul.f32 %v80, %v112
    %v145 = vmul.f32 %v81, %v113
    %v146 = vmul.f32 %v82, %v114
    %v147 = vmul.f32 %v83, %v115
    %v148 = vmul.f32 %v84, %v116
    %v149 = vmul.f32 %v85, %v117
    %v150 = vmul.f32 %v86, %v118
    %v151 = vmul.f32 %v87, %v119
    %v152 = vmul.f32 %v88, %v120
    %v153 = vmul.f32 %v89, %v121
    %v154 = vmul.f32 %v90, %v122
    %v155 = vmul.f32 %v91, %v123
    %v156 = vmul.f32 %v92, %v124
    %v157 = vmul.f32 %v93, %v125
    %v158 = vmul.f32 %v94, %v126
    %v159 = vmul.f32 %v95, %v127
    %v160 = vmul.f32 %v96, %v128
    %v161 = vmul.f32 %v97, %v129
    %v162 = vmul.f32 %v98, %v130
    %v163 = vmul.f32 %v99, %v131
    %v164 = vmul.f32 %v100, %v132
    %v165 = vadd.f32 %v133, %v134
    %v166 = vadd.f32 %v165, %v135
    %v167 = vadd.f32 %v166, %v136
    %v168 = vrot.slane %v167, 4
    %v169 = vadd.f32 %v167, %v168
    %v170 = vrot.slane %v169, 2
    %v171 = vadd.f32 %v169, %v170
    %v172 = vrot.slane %v171, 1
    %v173 = vadd.f32 %v171, %v172
    %v174 = vadd.f32 %v137, %v138
    %v175 = vadd.f32 %v174, %v139
    %v176 = vadd.f32 %v175, %v140
    %v177 = vrot.slane %v176, 4
    %v178 = vadd.f32 %v176, %v177
    %v179 = vrot.slane %v178, 2
    %v180 = vadd.f32 %v178, %v179
    %v181 = vrot.slane %v180, 1
    %v182 = vadd.f32 %v180, %v181
    %v183 = vadd.f32 %v141, %v142
    %v184 = vadd.f32 %v183, %v143
    %v185 = vadd.f32 %v184, %v144
    %v186 = vrot.slane %v185, 4
    %v187 = vadd.f32 %v185, %v186
    %v188 = vrot.slane %v187, 2
    %v189 = vadd.f32 %v187, %v188
    %v190 = vrot.slane %v189, 1
    %v191 = vadd.f32 %v189, %v190
    %v192 = vadd.f32 %v145, %v146
    %v193 = vadd.f32 %v192, %v147
    %v194 = vadd.f32 %v193, %v148
    %v195 = vrot.slane %v194, 4
    %v196 = vadd.f32 %v194, %v195
    %v197 = vrot.slane %v196, 2
    %v198 = vadd.f32 %v196, %v197
    %v199 = vrot.slane %v198, 1
    %v200 = vadd.f32 %v198, %v199
    %v201 = vadd.f32 %v149, %v150
    %v202 = vadd.f32 %v201, %v151
    %v203 = vadd.f32 %v202, %v152
    %v204 = vrot.slane %v203, 4
    %v205 = vadd.f32 %v203, %v204
    %v206 = vrot.slane %v205, 2
    %v207 = vadd.f32 %v205, %v206
    %v208 = vrot.slane %v207, 1
    %v209 = vadd.f32 %v207, %v208
    %v210 = vadd.f32 %v153, %v154
    %v211 = vadd.f32 %v210, %v155
    %v212 = vadd.f32 %v211, %v156
    %v213 = vrot.slane %v212, 4
    %v214 = vadd.f32 %v212, %v213
    %v215 = vrot.slane %v214, 2
    %v216 = vadd.f32 %v214, %v215
    %v217 = vrot.slane %v216, 1
    %v218 = vadd.f32 %v216, %v217
    %v219 = vadd.f32 %v157, %v158
    %v220 = vadd.f32 %v219, %v159
    %v221 = vadd.f32 %v220, %v160
    %v222 = vrot.slane %v221, 4
    %v223 = vadd.f32 %v221, %v222
    %v224 = vrot.slane %v223, 2
    %v225 = vadd.f32 %v223, %v224
    %v226 = vrot.slane %v225, 1
    %v227 = vadd.f32 %v225, %v226
    %v228 = vadd.f32 %v161, %v162
    %v229 = vadd.f32 %v228, %v163
    %v230 = vadd.f32 %v229, %v164
    %v231 = vrot.slane %v230, 4
    %v232 = vadd.f32 %v230, %v231
    %v233 = vrot.slane %v232, 2
    %v234 = vadd.f32 %v232, %v233
    %v235 = vrot.slane %v234, 1
    %v236 = vadd.f32 %v234, %v235
    %v237 = vld [vmem:[#allocation7] sm:$0xff]
    %v238 = vld [vmem:[#allocation8] sm:$0xff]
    %v239 = vmul.f32 %v237, %v238
    %vm248 = vcmask 1041409
    %v249 = vsel %vm248, %v182, %v173
    %vm250 = vcmask 1042434
    %v251 = vsel %vm250, %v191, %v249
    %vm252 = vcmask 1043459
    %v253 = vsel %vm252, %v200, %v251
    %vm254 = vcmask 1044484
    %v255 = vsel %vm254, %v209, %v253
    %vm256 = vcmask 1045509
    %v257 = vsel %vm256, %v218, %v255
    %vm258 = vcmask 1046534
    %v259 = vsel %vm258, %v227, %v257
    %vm260 = vcmask 1047559
    %v261 = vsel %vm260, %v236, %v259
    %v263 = vmul.f32 %v239, %v261
    %264 = vst [vmem:[#allocation10] sm:$0xff] %v263
    // Predicated region
    $region34: #{tpu_custom_call.1} parent=1 // pred_check
      _
    $region35: #{tpu_custom_call.1} parent=1 // pred_check_branch
      %266 = sbr.rel (0) target = $region37
    $region36: #{tpu_custom_call.1} parent=1 // pred_region
      %s268 = ssub.s32 128, 128
      %269 = vsyncadd [#allocation4], %s268
      %s271 = sshll.u32 [#allocation10], 4
      %s272 = int_to_ptr.vmem [resolvable:$true] %s271
      %274 = dma.vmem_to_hbm [thread:$0]  %s272, 128, %s4, [#allocation4]
    $region37: #{tpu_custom_call.1} parent=1 // pred_fallthru
      _
    // Predicated region
    $region38: #{tpu_custom_call.1} parent=1 // pred_check
      _
    $region39: #{tpu_custom_call.1} parent=1 // pred_check_branch
      %276 = sbr.rel (0) target = $region41
    $region40: #{tpu_custom_call.1} parent=1 // pred_region
      %277 = dma.done [#allocation4], 128
    $region41: #{tpu_custom_call.1} parent=1 // pred_fallthru
      _
    %278 = vsyncpa [#allocation3], 1
    %279 = vsyncpa [#allocation6], 1
    %280 = vsyncpa [#allocation9], 1
    %281 = vsyncpa [#allocation4], 1

</llo_original>
